<compile_context>
chip_gen: v7x
topology: tpu7x:2x2x1
jax: 0.10.0
libtpu: 0.0.40
codegen_flags: <defaults>
</compile_context>

<pallas_src>
import functools

import jax
import jax.numpy as jnp
from jax.experimental import pallas as pl
from jax.experimental.pallas import tpu as pltpu

EPS = 1e-5        # PyTorch BatchNorm1d default eps
LANES = 128
SUBLANES = 8


def _logsignature_channels_level2(path_dim: int) -> int:
    # Lyndon words of length <= 2 over an alphabet of size path_dim.
    return path_dim + path_dim * (path_dim - 1) // 2


def _round_up(x: int, m: int) -> int:
    return (x + m - 1) // m * m


def _vmem_capacity_bytes() -> int:
    """Per-TensorCore VMEM capacity; conservative fallback if the query fails."""
    try:
        return int(pltpu.get_tpu_info().vmem_capacity_bytes)
    except Exception:
        return 64 * 1024 * 1024   # v7x-sized fallback (smallest generation)


def _estimate_vmem_bytes(batch: int, in_rows: int, feat: int) -> int:
    """f32 VMEM footprint: single-buffered operands + activation temporaries."""
    def tile(r, c):
        return _round_up(max(r, 1), SUBLANES) * _round_up(c, LANES) * 4

    slab = tile(in_rows + 2 * feat + 8, feat)
    io = tile(batch, in_rows) + tile(batch, feat)          # z + output
    temps = 3 * tile(batch, feat)                          # h, centered copy, square
    return slab + io + temps


def _brownian_logsig_kernel(z_ref, p_ref, o_ref, *, input_dim, in_rows, feat):
    """Whole MLP (3 matmuls + 2 batchnorms + 3 sigmoids) in one invocation.

    Parameter slab rows (all lane-padded to `feat`):
      [0, in_rows)                       : w1   (only first input_dim rows used)
      [in_rows, in_rows+feat)            : w2
      [in_rows+feat, in_rows+2*feat)     : w3
      [in_rows+2*feat, in_rows+2*feat+8) : b1, b2, g2, be2, b3, g3, be3, <zero>
    """
    z = z_ref[...]
    batch = z.shape[0]
    inv_b = 1.0 / batch
    ones_row = jnp.ones((1, batch), jnp.float32)   # hoisted once, reused by both BNs

    w1 = p_ref[0:input_dim, :]
    w2 = p_ref[in_rows:in_rows + feat, :]
    w3 = p_ref[in_rows + feat:in_rows + 2 * feat, :]
    v = p_ref[in_rows + 2 * feat:in_rows + 2 * feat + 8, :]
    b1, b2, g2, be2 = v[0:1], v[1:2], v[2:3], v[3:4]
    b3, g3, be3 = v[4:5], v[5:6], v[6:7]

    def sigmoid(x):
        # One EUP push (tanh) + two cheap VPU ops, instead of exp + reciprocal.
        return 0.5 * jnp.tanh(0.5 * x) + 0.5

    def batchnorm(x, gamma, beta):
        # Batch-axis (sublane) sums on the otherwise-idle MXU; centered variance.
        mu = jnp.dot(ones_row, x, preferred_element_type=jnp.float32) * inv_b
        xc = x - mu
        var = jnp.dot(ones_row, xc * xc, preferred_element_type=jnp.float32) * inv_b
        return xc * jax.lax.rsqrt(var + EPS) * gamma + beta

    # --- block 1: Linear + Sigmoid (no normalization) ---
    h = sigmoid(jnp.dot(z, w1, preferred_element_type=jnp.float32) + b1)
    # --- block 2: Linear + BatchNorm1d (training stats) + Sigmoid ---
    h = sigmoid(batchnorm(jnp.dot(h, w2, preferred_element_type=jnp.float32) + b2,
                          g2, be2))
    # --- block 3: Linear + BatchNorm1d (training stats) + Sigmoid ---
    # Padded columns are all-zero pre-BN -> normalized 0 -> sigmoid 0.5, sliced off.
    h = sigmoid(batchnorm(jnp.dot(h, w3, preferred_element_type=jnp.float32) + b3,
                          g3, be3))
    o_ref[...] = h


def init_params(key, input_dim: int, hidden_dim: int, path_dim: int):
    """Deterministic synthetic parameters (normal weights, near-identity BN)."""
    out_dim = _logsignature_channels_level2(path_dim)
    ks = jax.random.split(key, 10)
    f32 = jnp.float32
    params = {
        # Linear weights stored as [in, out]; per-feature vectors as [1, out].
        "w1": 0.1 * jax.random.normal(ks[0], (input_dim, hidden_dim), f32),
        "b1": 0.1 * jax.random.normal(ks[1], (1, hidden_dim), f32),
        "w2": 0.1 * jax.random.normal(ks[2], (hidden_dim, hidden_dim), f32),
        "b2": 0.1 * jax.random.normal(ks[3], (1, hidden_dim), f32),
        "g2": 1.0 + 0.1 * jax.random.normal(ks[4], (1, hidden_dim), f32),
        "be2": 0.1 * jax.random.normal(ks[5], (1, hidden_dim), f32),
        "w3": 0.1 * jax.random.normal(ks[6], (hidden_dim, out_dim), f32),
        "b3": 0.1 * jax.random.normal(ks[7], (1, out_dim), f32),
        "g3": 1.0 + 0.1 * jax.random.normal(ks[8], (1, out_dim), f32),
        "be3": 0.1 * jax.random.normal(ks[9], (1, out_dim), f32),
    }
    return params, out_dim


def pack_params(params, input_dim: int, hidden_dim: int, out_dim: int):
    """Pack every parameter into one lane-dense (rows, feat) f32 slab."""
    feat = _round_up(max(hidden_dim, out_dim), LANES)
    in_rows = _round_up(input_dim, SUBLANES)

    def pad2(a, rows, cols, fill=0.0):
        return jnp.pad(a, ((0, rows - a.shape[0]), (0, cols - a.shape[1])),
                       constant_values=fill)

    w1 = pad2(params["w1"], in_rows, feat)          # zero pad rows/cols
    w2 = pad2(params["w2"], feat, feat)             # zero pad rows -> no pad-col leak
    w3 = pad2(params["w3"], feat, feat)
    vecs = jnp.concatenate(
        [pad2(params["b1"], 1, feat),
         pad2(params["b2"], 1, feat),
         pad2(params["g2"], 1, feat, 1.0),          # gamma pads = 1
         pad2(params["be2"], 1, feat),
         pad2(params["b3"], 1, feat),
         pad2(params["g3"], 1, feat, 1.0),
         pad2(params["be3"], 1, feat),
         jnp.zeros((1, feat), jnp.float32)],        # pad vector block to 8 rows
        axis=0)
    slab = jnp.concatenate([w1, w2, w3, vecs], axis=0)   # (in_rows + 2*feat + 8, feat)
    return slab


@functools.partial(jax.jit, static_argnames=("out_dim", "return_padded"))
def brownian_logsig_generator(z, param_slab, *, out_dim, return_padded=False):
    """Pallas wrapper: single invocation, every operand resident in VMEM (single-buffered)."""
    batch, input_dim = z.shape
    feat = param_slab.shape[1]
    in_rows = param_slab.shape[0] - 2 * feat - 8
    assert in_rows >= input_dim, "param slab inconsistent with z"

    # Single-pass BatchNorm needs the whole batch in one block; budget against
    # this generation's VMEM (v7x: 64 MiB/TC, v5e/v6e: 128 MiB).
    est = _estimate_vmem_bytes(batch, in_rows, feat)
    budget = _vmem_capacity_bytes() - (8 << 20)     # leave headroom for the compiler
    assert est <= budget, "batch too large for single-block BatchNorm"
    # TODO(synk): batch-tiled grid with two-pass BN (per-feature sum/sumsq scratch
    # over an "arbitrary" batch axis) + v7x dual-TensorCore sharding with a
    # cross-core BN reduction (CMEM partials + core_barrier) for batches that
    # exceed the single-block VMEM budget.

    kernel = functools.partial(_brownian_logsig_kernel,
                               input_dim=input_dim, in_rows=in_rows, feat=feat)

    vmem_spec = pl.BlockSpec(memory_space=pltpu.MemorySpace.VMEM)
    out_padded = pl.pallas_call(
        kernel,
        out_shape=jax.ShapeDtypeStruct((batch, feat), jnp.float32),
        in_specs=[vmem_spec, vmem_spec],
        out_specs=pl.BlockSpec(memory_space=pltpu.MemorySpace.VMEM),
        compiler_params=pltpu.CompilerParams(
            vmem_limit_bytes=int(min(max(2 * est, 32 << 20), budget))),
    )(z, param_slab)

    if return_padded:
        return out_padded          # keep lane-dense padded result for downstream fusion
    return out_padded[:, :out_dim]   # drop the lane padding


def _reference(z, params):
    """Plain-JAX reference mirroring the PyTorch forward pass (centered BN stats)."""
    h = jax.nn.sigmoid(z @ params["w1"] + params["b1"])
    h = h @ params["w2"] + params["b2"]
    mu = jnp.mean(h, axis=0, keepdims=True)
    var = jnp.mean((h - mu) ** 2, axis=0, keepdims=True)
    h = jax.nn.sigmoid((h - mu) / jnp.sqrt(var + EPS) * params["g2"] + params["be2"])
    h = h @ params["w3"] + params["b3"]
    mu = jnp.mean(h, axis=0, keepdims=True)
    var = jnp.mean((h - mu) ** 2, axis=0, keepdims=True)
    return jax.nn.sigmoid((h - mu) / jnp.sqrt(var + EPS) * params["g3"] + params["be3"])


if __name__ == "__main__":
    # batch=128: sublane-aligned and large enough to amortize launch overhead,
    # still tiny (z is 8 KiB). Feature sizes match the module defaults.
    batch, input_dim, hidden_dim, path_dim = 128, 16, 32, 5

    key = jax.random.PRNGKey(0)
    kz, kp = jax.random.split(key)
    params, out_dim = init_params(kp, input_dim, hidden_dim, path_dim)
    z = jax.random.normal(kz, (batch, input_dim), jnp.float32)

    slab = pack_params(params, input_dim, hidden_dim, out_dim)
    out = brownian_logsig_generator(z, slab, out_dim=out_dim)
    out = jax.block_until_ready(out)

    ref = _reference(z, params)
    assert out.shape == (batch, out_dim), out.shape
    assert jnp.allclose(out, ref, atol=1e-4, rtol=1e-4), (
        "mismatch vs reference, max abs err = %e"
        % float(jnp.max(jnp.abs(out - ref))))

    print("KERNEL_OK")
</pallas_src>

<mosaic_0001>
module attributes {stable_mosaic.version = 11 : i64} {
  func.func @_brownian_logsig_kernel(%arg0: memref<128x16xf32, #tpu.memory_space<vmem>>, %arg1: memref<280x128xf32, #tpu.memory_space<vmem>>, %arg2: memref<128x128xf32, #tpu.memory_space<vmem>>) attributes {dimension_semantics = [], scalar_prefetch = 0 : i64, scratch_operands = 0 : i64, tpu.core_type = #tpu.core_type<tc>} {
    %c0 = arith.constant 0 : index
    %c0_0 = arith.constant 0 : index
    %0 = vector.load %arg0[%c0, %c0_0] : memref<128x16xf32, #tpu.memory_space<vmem>>, vector<128x16xf32>
    %cst = arith.constant 1.000000e+00 : f32
    %1 = vector.broadcast %cst : f32 to vector<1x128xf32>
    %c0_1 = arith.constant 0 : index
    %c0_2 = arith.constant 0 : index
    %2 = vector.load %arg1[%c0_1, %c0_2] : memref<280x128xf32, #tpu.memory_space<vmem>>, vector<16x128xf32>
    %c16 = arith.constant 16 : index
    %c0_3 = arith.constant 0 : index
    %3 = vector.load %arg1[%c16, %c0_3] : memref<280x128xf32, #tpu.memory_space<vmem>>, vector<128x128xf32>
    %c144 = arith.constant 144 : index
    %c0_4 = arith.constant 0 : index
    %4 = vector.load %arg1[%c144, %c0_4] : memref<280x128xf32, #tpu.memory_space<vmem>>, vector<128x128xf32>
    %c272 = arith.constant 272 : index
    %c0_5 = arith.constant 0 : index
    %5 = vector.load %arg1[%c272, %c0_5] : memref<280x128xf32, #tpu.memory_space<vmem>>, vector<8x128xf32>
    %6 = vector.extract_strided_slice %5 {offsets = [0, 0], sizes = [1, 128], strides = [1, 1]} : vector<8x128xf32> to vector<1x128xf32>
    %7 = vector.extract_strided_slice %5 {offsets = [1, 0], sizes = [1, 128], strides = [1, 1]} : vector<8x128xf32> to vector<1x128xf32>
    %8 = vector.extract_strided_slice %5 {offsets = [2, 0], sizes = [1, 128], strides = [1, 1]} : vector<8x128xf32> to vector<1x128xf32>
    %9 = vector.extract_strided_slice %5 {offsets = [3, 0], sizes = [1, 128], strides = [1, 1]} : vector<8x128xf32> to vector<1x128xf32>
    %10 = vector.extract_strided_slice %5 {offsets = [4, 0], sizes = [1, 128], strides = [1, 1]} : vector<8x128xf32> to vector<1x128xf32>
    %11 = vector.extract_strided_slice %5 {offsets = [5, 0], sizes = [1, 128], strides = [1, 1]} : vector<8x128xf32> to vector<1x128xf32>
    %12 = vector.extract_strided_slice %5 {offsets = [6, 0], sizes = [1, 128], strides = [1, 1]} : vector<8x128xf32> to vector<1x128xf32>
    %cst_6 = arith.constant dense<0.000000e+00> : vector<128x128xf32>
    %13 = tpu.matmul %0, %2, %cst_6 {dimension_numbers = #tpu.dot_dimension_numbers<[1], [0], [0], [1], [0, 0, 1, 1], [], []>} : vector<128x16xf32>, vector<16x128xf32>, vector<128x128xf32> -> vector<128x128xf32>
    %14 = vector.broadcast %6 : vector<1x128xf32> to vector<128x128xf32>
    %15 = arith.addf %13, %14 : vector<128x128xf32>
    %cst_7 = arith.constant 5.000000e-01 : f32
    %16 = vector.broadcast %cst_7 : f32 to vector<128x128xf32>
    %17 = arith.mulf %16, %15 : vector<128x128xf32>
    %18 = math.tanh %17 : vector<128x128xf32>
    %cst_8 = arith.constant 5.000000e-01 : f32
    %19 = vector.broadcast %cst_8 : f32 to vector<128x128xf32>
    %20 = arith.mulf %19, %18 : vector<128x128xf32>
    %cst_9 = arith.constant 5.000000e-01 : f32
    %21 = vector.broadcast %cst_9 : f32 to vector<128x128xf32>
    %22 = arith.addf %20, %21 : vector<128x128xf32>
    %cst_10 = arith.constant dense<0.000000e+00> : vector<128x128xf32>
    %23 = tpu.matmul %22, %3, %cst_10 {dimension_numbers = #tpu.dot_dimension_numbers<[1], [0], [0], [1], [0, 0, 1, 1], [], []>} : vector<128x128xf32>, vector<128x128xf32>, vector<128x128xf32> -> vector<128x128xf32>
    %24 = vector.broadcast %7 : vector<1x128xf32> to vector<128x128xf32>
    %25 = arith.addf %23, %24 : vector<128x128xf32>
    %cst_11 = arith.constant dense<0.000000e+00> : vector<1x128xf32>
    %26 = tpu.matmul %1, %25, %cst_11 {dimension_numbers = #tpu.dot_dimension_numbers<[1], [0], [0], [1], [0, 0, 1, 1], [], []>} : vector<1x128xf32>, vector<128x128xf32>, vector<1x128xf32> -> vector<1x128xf32>
    %cst_12 = arith.constant 7.812500e-03 : f32
    %27 = vector.broadcast %cst_12 : f32 to vector<1x128xf32>
    %28 = arith.mulf %26, %27 : vector<1x128xf32>
    %29 = vector.broadcast %28 : vector<1x128xf32> to vector<128x128xf32>
    %30 = arith.subf %25, %29 : vector<128x128xf32>
    %31 = arith.mulf %30, %30 : vector<128x128xf32>
    %cst_13 = arith.constant dense<0.000000e+00> : vector<1x128xf32>
    %32 = tpu.matmul %1, %31, %cst_13 {dimension_numbers = #tpu.dot_dimension_numbers<[1], [0], [0], [1], [0, 0, 1, 1], [], []>} : vector<1x128xf32>, vector<128x128xf32>, vector<1x128xf32> -> vector<1x128xf32>
    %cst_14 = arith.constant 7.812500e-03 : f32
    %33 = vector.broadcast %cst_14 : f32 to vector<1x128xf32>
    %34 = arith.mulf %32, %33 : vector<1x128xf32>
    %cst_15 = arith.constant 9.99999974E-6 : f32
    %35 = vector.broadcast %cst_15 : f32 to vector<1x128xf32>
    %36 = arith.addf %34, %35 : vector<1x128xf32>
    %37 = math.rsqrt %36 : vector<1x128xf32>
    %38 = vector.broadcast %37 : vector<1x128xf32> to vector<128x128xf32>
    %39 = arith.mulf %30, %38 : vector<128x128xf32>
    %40 = vector.broadcast %8 : vector<1x128xf32> to vector<128x128xf32>
    %41 = arith.mulf %39, %40 : vector<128x128xf32>
    %42 = vector.broadcast %9 : vector<1x128xf32> to vector<128x128xf32>
    %43 = arith.addf %41, %42 : vector<128x128xf32>
    %cst_16 = arith.constant 5.000000e-01 : f32
    %44 = vector.broadcast %cst_16 : f32 to vector<128x128xf32>
    %45 = arith.mulf %44, %43 : vector<128x128xf32>
    %46 = math.tanh %45 : vector<128x128xf32>
    %cst_17 = arith.constant 5.000000e-01 : f32
    %47 = vector.broadcast %cst_17 : f32 to vector<128x128xf32>
    %48 = arith.mulf %47, %46 : vector<128x128xf32>
    %cst_18 = arith.constant 5.000000e-01 : f32
    %49 = vector.broadcast %cst_18 : f32 to vector<128x128xf32>
    %50 = arith.addf %48, %49 : vector<128x128xf32>
    %cst_19 = arith.constant dense<0.000000e+00> : vector<128x128xf32>
    %51 = tpu.matmul %50, %4, %cst_19 {dimension_numbers = #tpu.dot_dimension_numbers<[1], [0], [0], [1], [0, 0, 1, 1], [], []>} : vector<128x128xf32>, vector<128x128xf32>, vector<128x128xf32> -> vector<128x128xf32>
    %52 = vector.broadcast %10 : vector<1x128xf32> to vector<128x128xf32>
    %53 = arith.addf %51, %52 : vector<128x128xf32>
    %cst_20 = arith.constant dense<0.000000e+00> : vector<1x128xf32>
    %54 = tpu.matmul %1, %53, %cst_20 {dimension_numbers = #tpu.dot_dimension_numbers<[1], [0], [0], [1], [0, 0, 1, 1], [], []>} : vector<1x128xf32>, vector<128x128xf32>, vector<1x128xf32> -> vector<1x128xf32>
    %cst_21 = arith.constant 7.812500e-03 : f32
    %55 = vector.broadcast %cst_21 : f32 to vector<1x128xf32>
    %56 = arith.mulf %54, %55 : vector<1x128xf32>
    %57 = vector.broadcast %56 : vector<1x128xf32> to vector<128x128xf32>
    %58 = arith.subf %53, %57 : vector<128x128xf32>
    %59 = arith.mulf %58, %58 : vector<128x128xf32>
    %cst_22 = arith.constant dense<0.000000e+00> : vector<1x128xf32>
    %60 = tpu.matmul %1, %59, %cst_22 {dimension_numbers = #tpu.dot_dimension_numbers<[1], [0], [0], [1], [0, 0, 1, 1], [], []>} : vector<1x128xf32>, vector<128x128xf32>, vector<1x128xf32> -> vector<1x128xf32>
    %cst_23 = arith.constant 7.812500e-03 : f32
    %61 = vector.broadcast %cst_23 : f32 to vector<1x128xf32>
    %62 = arith.mulf %60, %61 : vector<1x128xf32>
    %cst_24 = arith.constant 9.99999974E-6 : f32
    %63 = vector.broadcast %cst_24 : f32 to vector<1x128xf32>
    %64 = arith.addf %62, %63 : vector<1x128xf32>
    %65 = math.rsqrt %64 : vector<1x128xf32>
    %66 = vector.broadcast %65 : vector<1x128xf32> to vector<128x128xf32>
    %67 = arith.mulf %58, %66 : vector<128x128xf32>
    %68 = vector.broadcast %11 : vector<1x128xf32> to vector<128x128xf32>
    %69 = arith.mulf %67, %68 : vector<128x128xf32>
    %70 = vector.broadcast %12 : vector<1x128xf32> to vector<128x128xf32>
    %71 = arith.addf %69, %70 : vector<128x128xf32>
    %cst_25 = arith.constant 5.000000e-01 : f32
    %72 = vector.broadcast %cst_25 : f32 to vector<128x128xf32>
    %73 = arith.mulf %72, %71 : vector<128x128xf32>
    %74 = math.tanh %73 : vector<128x128xf32>
    %cst_26 = arith.constant 5.000000e-01 : f32
    %75 = vector.broadcast %cst_26 : f32 to vector<128x128xf32>
    %76 = arith.mulf %75, %74 : vector<128x128xf32>
    %cst_27 = arith.constant 5.000000e-01 : f32
    %77 = vector.broadcast %cst_27 : f32 to vector<128x128xf32>
    %78 = arith.addf %76, %77 : vector<128x128xf32>
    %c0_28 = arith.constant 0 : index
    %c0_29 = arith.constant 0 : index
    %79 = vector.load %arg2[%c0_28, %c0_29] : memref<128x128xf32, #tpu.memory_space<vmem>>, vector<128x128xf32>
    tpu.vector_store %arg2[%c0_28, %c0_29], %78 {strides = array<i32>} : memref<128x128xf32, #tpu.memory_space<vmem>>, vector<128x128xf32>,
    return
  }
}

</mosaic_0001>

<llo_original>
// kernel: brownian_logsig_generator.1
$region0: #{brownian_logsig_generator.1}
  #allocation0 [shape = 'u32[]', space=smem, size = 0x4, offset = 0x4, fixed_abs, tag = 'smem constant byte address 0x4 - core index']
  #allocation1 [shape = 'u32[144,128]{1,0:T(1,128)}', space=vmem, size = 0x12000, scoped, tag = 'internal scratch']
  %s0 = inlined_call_operand.vmem [shape: f32[128,16], index: 0, kind: input, shape index: {}]
  %s1 = inlined_call_operand.hbm [shape: f32[280,128], index: 1, kind: input, shape index: {}]
  %s2 = inlined_call_operand.vmem [shape: f32[128,128], index: 2, kind: output, shape index: {}]
  %s3 = sld [smem:[#allocation0]]
  $region22: #{brownian_logsig_generator.1} parent=0
    _
  %s5 = ssub.s32 1, %s3
  %s6 = scalar_select 0, %s5, %s3
  $region1: #{brownian_logsig_generator.1} parent=0
    #allocation2 [shape = 'u8[143360]{0}', space=vmem, size = 0x23000, scoped, tag = 'input window, operand 1, single buffered']
    #allocation3 [shape = 's32[1]{0}', space=sflag, size = 0x4, scoped, tag = 'scoped memory for brownian_logsig_generator.1']
    %7 = vsyncpa [#allocation3], 0
    // Predicated region
    $region2: #{brownian_logsig_generator.1} parent=1 // pred_check
      _
    $region3: #{brownian_logsig_generator.1} parent=1 // pred_check_branch
      %9 = sbr.rel (0) target = $region5
    $region4: #{brownian_logsig_generator.1} parent=1 // pred_region
      _
    $region5: #{brownian_logsig_generator.1} parent=1 // pred_fallthru
      _
    // Predicated region
    $region6: #{brownian_logsig_generator.1} parent=1 // pred_check
      _
    $region7: #{brownian_logsig_generator.1} parent=1 // pred_check_branch
      %11 = sbr.rel (0) target = $region9
    $region8: #{brownian_logsig_generator.1} parent=1 // pred_region
      %s13 = ssub.s32 4480, 4480
      %14 = vsyncadd [#allocation3], %s13
      %s15 = sshll.u32 [#allocation2], 4
      %s16 = int_to_ptr.vmem [resolvable:$true] %s15
      %21 = dma.hbm_to_vmem [thread:$0]  %s1, 4480, %s16, [#allocation3], 128, 128, 8
    $region9: #{brownian_logsig_generator.1} parent=1 // pred_fallthru
      _
    // Predicated region
    $region10: #{brownian_logsig_generator.1} parent=1 // pred_check
      _
    $region11: #{brownian_logsig_generator.1} parent=1 // pred_check_branch
      %23 = sbr.rel (0) target = $region13
    $region12: #{brownian_logsig_generator.1} parent=1 // pred_region
      %24 = dma.done [#allocation3], 4480
    $region13: #{brownian_logsig_generator.1} parent=1 // pred_fallthru
      _
    %v25 = vld [vmem:[%s0] sm:$0xff]
    %v26 = vld [vmem:[%s0 + $0x8] sm:$0xff]
    %v27 = vld [vmem:[%s0 + $0x10] sm:$0xff]
    %v28 = vld [vmem:[%s0 + $0x18] sm:$0xff]
    %v29 = vld [vmem:[%s0 + $0x20] sm:$0xff]
    %v30 = vld [vmem:[%s0 + $0x28] sm:$0xff]
    %v31 = vld [vmem:[%s0 + $0x30] sm:$0xff]
    %v32 = vld [vmem:[%s0 + $0x38] sm:$0xff]
    %v33 = vld [vmem:[%s0 + $0x40] sm:$0xff]
    %v34 = vld [vmem:[%s0 + $0x48] sm:$0xff]
    %v35 = vld [vmem:[%s0 + $0x50] sm:$0xff]
    %v36 = vld [vmem:[%s0 + $0x58] sm:$0xff]
    %v37 = vld [vmem:[%s0 + $0x60] sm:$0xff]
    %v38 = vld [vmem:[%s0 + $0x68] sm:$0xff]
    %v39 = vld [vmem:[%s0 + $0x70] sm:$0xff]
    %v40 = vld [vmem:[%s0 + $0x78] sm:$0xff]
    %v41 = vld [vmem:[#allocation2] sm:$0xff]
    %v42 = vld [vmem:[#allocation2 + $0x8] sm:$0xff]
    %v43 = vld [vmem:[#allocation2 + $0x10] sm:$0xff]
    %v44 = vld [vmem:[#allocation2 + $0x18] sm:$0xff]
    %v45 = vld [vmem:[#allocation2 + $0x20] sm:$0xff]
    %v46 = vld [vmem:[#allocation2 + $0x28] sm:$0xff]
    %v47 = vld [vmem:[#allocation2 + $0x30] sm:$0xff]
    %v48 = vld [vmem:[#allocation2 + $0x38] sm:$0xff]
    %v49 = vld [vmem:[#allocation2 + $0x40] sm:$0xff]
    %v50 = vld [vmem:[#allocation2 + $0x48] sm:$0xff]
    %v51 = vld [vmem:[#allocation2 + $0x50] sm:$0xff]
    %v52 = vld [vmem:[#allocation2 + $0x58] sm:$0xff]
    %v53 = vld [vmem:[#allocation2 + $0x60] sm:$0xff]
    %v54 = vld [vmem:[#allocation2 + $0x68] sm:$0xff]
    %v55 = vld [vmem:[#allocation2 + $0x70] sm:$0xff]
    %v56 = vld [vmem:[#allocation2 + $0x78] sm:$0xff]
    %v57 = vld [vmem:[#allocation2 + $0x80] sm:$0xff]
    %v58 = vld [vmem:[#allocation2 + $0x88] sm:$0xff]
    %v59 = vld [vmem:[#allocation2 + $0x90] sm:$0xff]
    %v60 = vld [vmem:[#allocation2 + $0x98] sm:$0xff]
    %v61 = vld [vmem:[#allocation2 + $0xa0] sm:$0xff]
    %v62 = vld [vmem:[#allocation2 + $0xa8] sm:$0xff]
    %v63 = vld [vmem:[#allocation2 + $0xb0] sm:$0xff]
    %v64 = vld [vmem:[#allocation2 + $0xb8] sm:$0xff]
    %v65 = vld [vmem:[#allocation2 + $0xc0] sm:$0xff]
    %v66 = vld [vmem:[#allocation2 + $0xc8] sm:$0xff]
    %v67 = vld [vmem:[#allocation2 + $0xd0] sm:$0xff]
    %v68 = vld [vmem:[#allocation2 + $0xd8] sm:$0xff]
    %v69 = vld [vmem:[#allocation2 + $0xe0] sm:$0xff]
    %v70 = vld [vmem:[#allocation2 + $0xe8] sm:$0xff]
    %v71 = vld [vmem:[#allocation2 + $0xf0] sm:$0xff]
    %v72 = vld [vmem:[#allocation2 + $0xf8] sm:$0xff]
    %v73 = vld [vmem:[#allocation2 + $0x100] sm:$0xff]
    %v74 = vld [vmem:[#allocation2 + $0x108] sm:$0xff]
    %v75 = vld [vmem:[#allocation2 + $0x110] sm:$0xff]
    %v76 = vlaneseq
    %v77 = vshrl.u32 %v76, 7
    %v78 = vsub.s32 0, %v77
    %v79 = vrot.slane %v75, %v78
    %vm80 = vcmask 130048
    %v82 = vsel %vm80, %v25, 0
    %v85 = vsel %vm80, %v26, 0
    %v88 = vsel %vm80, %v27, 0
    %v91 = vsel %vm80, %v28, 0
    %v94 = vsel %vm80, %v29, 0
    %v97 = vsel %vm80, %v30, 0
    %v100 = vsel %vm80, %v31, 0
    %v103 = vsel %vm80, %v32, 0
    %v106 = vsel %vm80, %v33, 0
    %v109 = vsel %vm80, %v34, 0
    %v112 = vsel %vm80, %v35, 0
    %v115 = vsel %vm80, %v36, 0
    %v118 = vsel %vm80, %v37, 0
    %v121 = vsel %vm80, %v38, 0
    %v124 = vsel %vm80, %v39, 0
    %v127 = vsel %vm80, %v40, 0
    %129 = vmatprep.subr.mxu0 0.0
    %130 = vmatpush1.msra.mxu0 %v41
    %131 = vmatprep.subr.mxu0 0.0
    %132 = vmatpush1.msra.mxu0 %v42
    %133 = vmatprep.subr.mxu0 0.0
    %134 = vmatpush1.msra.mxu0 0.0
    %135 = vmatprep.subr.mxu0 0.0
    %136 = vmatpush1.msra.mxu0 0.0
    %137 = vmatprep.subr.mxu0 0.0
    %138 = vmatpush1.msra.mxu0 0.0
    %139 = vmatprep.subr.mxu0 0.0
    %140 = vmatpush1.msra.mxu0 0.0
    %141 = vmatprep.subr.mxu0 0.0
    %142 = vmatpush1.msra.mxu0 0.0
    %143 = vmatprep.subr.mxu0 0.0
    %144 = vmatpush1.msra.mxu0 0.0
    %145 = vmatprep.subr.mxu0 0.0
    %146 = vmatpush1.msra.mxu0 0.0
    %147 = vmatprep.subr.mxu0 0.0
    %148 = vmatpush1.msra.mxu0 0.0
    %149 = vmatprep.subr.mxu0 0.0
    %150 = vmatpush1.msra.mxu0 0.0
    %151 = vmatprep.subr.mxu0 0.0
    %152 = vmatpush1.msra.mxu0 0.0
    %153 = vmatprep.subr.mxu0 0.0
    %154 = vmatpush1.msra.mxu0 0.0
    %155 = vmatprep.subr.mxu0 0.0
    %156 = vmatpush1.msra.mxu0 0.0
    %157 = vmatprep.subr.mxu0 0.0
    %158 = vmatpush1.msra.mxu0 0.0
    %159 = vmatprep.subr.mxu0 0.0
    %160 = vmatpush1.msra.mxu0 0.0
    %161 = vmatprep.subr.mxu0 0.0
    %162 = vmatpush1.msra.mxu0 0.0
    %163 = vmatprep.subr.mxu0 0.0
    %164 = vmatpush1.msra.mxu0 0.0
    %165 = vmatprep.subr.mxu0 0.0
    %166 = vmatpush1.msra.mxu0 0.0
    %167 = vmatprep.subr.mxu0 0.0
    %168 = vmatpush1.msra.mxu0 0.0
    %169 = vmatprep.subr.mxu0 0.0
    %170 = vmatpush1.msra.mxu0 0.0
    %171 = vmatprep.subr.mxu0 0.0
    %172 = vmatpush1.msra.mxu0 0.0
    %173 = vmatprep.subr.mxu0 0.0
    %174 = vmatpush1.msra.mxu0 0.0
    %175 = vmatprep.subr.mxu0 0.0
    %176 = vmatpush1.msra.mxu0 0.0
    %177 = vmatprep.subr.mxu0 0.0
    %178 = vmatpush1.msra.mxu0 0.0
    %179 = vmatprep.subr.mxu0 0.0
    %180 = vmatpush1.msra.mxu0 0.0
    %181 = vmatprep.subr.mxu0 0.0
    %182 = vmatpush1.msra.mxu0 0.0
    %183 = vmatprep.subr.mxu0 0.0
    %184 = vmatpush1.msra.mxu0 0.0
    %185 = vmatprep.subr.mxu0 0.0
    %186 = vmatpush1.msra.mxu0 0.0
    %187 = vmatprep.subr.mxu0 0.0
    %188 = vmatpush1.msra.mxu0 0.0
    %189 = vmatprep.subr.mxu0 0.0
    %190 = vmatpush1.msra.mxu0 0.0
    %191 = vmatprep.subr.mxu0 0.0
    %192 = vmatpush1.msra.mxu0 0.0
    %193 = vmatprep.mubr.f32.mxu0 0.0
    %194 = vmatmul.mubr.f32.gmra.mrb[0].mxu0 %v82
    %v195 = vpop.f32.mrb[0].mxu0
    %v196 = vadd.f32 %v79, %v195
    %v197 = vpop.f32.mrb[0].mxu0
    %198 = vmatprep.mubr.f32.mxu0 0.0
    %199 = vmatmul.mubr.f32.gmra.mrb[0].mxu0 %v85
    %v200 = vpop.f32.mrb[0].mxu0
    %v201 = vadd.f32 %v79, %v200
    %v202 = vpop.f32.mrb[0].mxu0
    %203 = vmatprep.mubr.f32.mxu0 0.0
    %204 = vmatmul.mubr.f32.gmra.mrb[0].mxu0 %v88
    %v205 = vpop.f32.mrb[0].mxu0
    %v206 = vadd.f32 %v79, %v205
    %v207 = vpop.f32.mrb[0].mxu0
    %208 = vmatprep.mubr.f32.mxu0 0.0
    %209 = vmatmul.mubr.f32.gmra.mrb[0].mxu0 %v91
    %v210 = vpop.f32.mrb[0].mxu0
    %v211 = vadd.f32 %v79, %v210
    %v212 = vpop.f32.mrb[0].mxu0
    %213 = vmatprep.mubr.f32.mxu0 0.0
    %214 = vmatmul.mubr.f32.gmra.mrb[0].mxu0 %v94
    %v215 = vpop.f32.mrb[0].mxu0
    %v216 = vadd.f32 %v79, %v215
    %v217 = vpop.f32.mrb[0].mxu0
    %218 = vmatprep.mubr.f32.mxu0 0.0
    %219 = vmatmul.mubr.f32.gmra.mrb[0].mxu0 %v97
    %v220 = vpop.f32.mrb[0].mxu0
    %v221 = vadd.f32 %v79, %v220
    %v222 = vpop.f32.mrb[0].mxu0
    %223 = vmatprep.mubr.f32.mxu0 0.0
    %224 = vmatmul.mubr.f32.gmra.mrb[0].mxu0 %v100
    %v225 = vpop.f32.mrb[0].mxu0
    %v226 = vadd.f32 %v79, %v225
    %v227 = vpop.f32.mrb[0].mxu0
    %228 = vmatprep.mubr.f32.mxu0 0.0
    %229 = vmatmul.mubr.f32.gmra.mrb[0].mxu0 %v103
    %v230 = vpop.f32.mrb[0].mxu0
    %v231 = vadd.f32 %v79, %v230
    %v232 = vpop.f32.mrb[0].mxu0
    %233 = vmatprep.mubr.f32.mxu0 0.0
    %234 = vmatmul.mubr.f32.gmra.mrb[0].mxu0 %v106
    %v235 = vpop.f32.mrb[0].mxu0
    %v236 = vadd.f32 %v79, %v235
    %v237 = vpop.f32.mrb[0].mxu0
    %238 = vmatprep.mubr.f32.mxu0 0.0
    %239 = vmatmul.mubr.f32.gmra.mrb[0].mxu0 %v109
    %v240 = vpop.f32.mrb[0].mxu0
    %v241 = vadd.f32 %v79, %v240
    %v242 = vpop.f32.mrb[0].mxu0
    %243 = vmatprep.mubr.f32.mxu0 0.0
    %244 = vmatmul.mubr.f32.gmra.mrb[0].mxu0 %v112
    %v245 = vpop.f32.mrb[0].mxu0
    %v246 = vadd.f32 %v79, %v245
    %v247 = vpop.f32.mrb[0].mxu0
    %248 = vmatprep.mubr.f32.mxu0 0.0
    %249 = vmatmul.mubr.f32.gmra.mrb[0].mxu0 %v115
    %v250 = vpop.f32.mrb[0].mxu0
    %v251 = vadd.f32 %v79, %v250
    %v252 = vpop.f32.mrb[0].mxu0
    %253 = vmatprep.mubr.f32.mxu0 0.0
    %254 = vmatmul.mubr.f32.gmra.mrb[0].mxu0 %v118
    %v255 = vpop.f32.mrb[0].mxu0
    %v256 = vadd.f32 %v79, %v255
    %v257 = vpop.f32.mrb[0].mxu0
    %258 = vmatprep.mubr.f32.mxu0 0.0
    %259 = vmatmul.mubr.f32.gmra.mrb[0].mxu0 %v121
    %v260 = vpop.f32.mrb[0].mxu0
    %v261 = vadd.f32 %v79, %v260
    %v262 = vpop.f32.mrb[0].mxu0
    %263 = vmatprep.mubr.f32.mxu0 0.0
    %264 = vmatmul.mubr.f32.gmra.mrb[0].mxu0 %v124
    %v265 = vpop.f32.mrb[0].mxu0
    %v266 = vadd.f32 %v79, %v265
    %v267 = vpop.f32.mrb[0].mxu0
    %268 = vmatprep.mubr.f32.mxu0 0.0
    %269 = vmatmul.mubr.f32.gmra.mrb[0].mxu0 %v127
    %v270 = vpop.f32.mrb[0].mxu0
    %v271 = vadd.f32 %v79, %v270
    %v272 = vpop.f32.mrb[0].mxu0
    %273 = vdwg.mxu0
    %v274 = vmul.f32 %v196, 0.5
    %v275 = vmul.f32 %v201, 0.5
    %v276 = vmul.f32 %v206, 0.5
    %v277 = vmul.f32 %v211, 0.5
    %v278 = vmul.f32 %v216, 0.5
    %v279 = vmul.f32 %v221, 0.5
    %v280 = vmul.f32 %v226, 0.5
    %v281 = vmul.f32 %v231, 0.5
    %v282 = vmul.f32 %v236, 0.5
    %v283 = vmul.f32 %v241, 0.5
    %v284 = vmul.f32 %v246, 0.5
    %v285 = vmul.f32 %v251, 0.5
    %v286 = vmul.f32 %v256, 0.5
    %v287 = vmul.f32 %v261, 0.5
    %v288 = vmul.f32 %v266, 0.5
    %v289 = vmul.f32 %v271, 0.5
    %v290 = vtanh.pop %v274
    %v291 = vtanh.pop %v275
    %v292 = vtanh.pop %v276
    %v293 = vtanh.pop %v277
    %v294 = vtanh.pop %v278
    %v295 = vtanh.pop %v279
    %v296 = vtanh.pop %v280
    %v297 = vtanh.pop %v281
    %v298 = vtanh.pop %v282
    %v299 = vtanh.pop %v283
    %v300 = vtanh.pop %v284
    %v301 = vtanh.pop %v285
    %v302 = vtanh.pop %v286
    %v303 = vtanh.pop %v287
    %v304 = vtanh.pop %v288
    %v305 = vtanh.pop %v289
    %v306 = vmul.f32 %v290, 0.5
    %v307 = vmul.f32 %v291, 0.5
    %v308 = vmul.f32 %v292, 0.5
    %v309 = vmul.f32 %v293, 0.5
    %v310 = vmul.f32 %v294, 0.5
    %v311 = vmul.f32 %v295, 0.5
    %v312 = vmul.f32 %v296, 0.5
    %v313 = vmul.f32 %v297, 0.5
    %v314 = vmul.f32 %v298, 0.5
    %v315 = vmul.f32 %v299, 0.5
    %v316 = vmul.f32 %v300, 0.5
    %v317 = vmul.f32 %v301, 0.5
    %v318 = vmul.f32 %v302, 0.5
    %v319 = vmul.f32 %v303, 0.5
    %v320 = vmul.f32 %v304, 0.5
    %v321 = vmul.f32 %v305, 0.5
    %v322 = vadd.f32 %v306, 0.5
    %v323 = vadd.f32 %v307, 0.5
    %v324 = vadd.f32 %v308, 0.5
    %v325 = vadd.f32 %v309, 0.5
    %v326 = vadd.f32 %v310, 0.5
    %v327 = vadd.f32 %v311, 0.5
    %v328 = vadd.f32 %v312, 0.5
    %v329 = vadd.f32 %v313, 0.5
    %v330 = vadd.f32 %v314, 0.5
    %v331 = vadd.f32 %v315, 0.5
    %v332 = vadd.f32 %v316, 0.5
    %v333 = vadd.f32 %v317, 0.5
    %v334 = vadd.f32 %v318, 0.5
    %v335 = vadd.f32 %v319, 0.5
    %v336 = vadd.f32 %v320, 0.5
    %v337 = vadd.f32 %v321, 0.5
    %v338 = vlaneseq
    %v339 = vshrl.u32 %v338, 7
    %v340 = vsub.s32 1, %v339
    %v341 = vrot.slane %v75, %v340
    %342 = vmatprep.subr.mxu0 0.0
    %343 = vmatpush1.msra.mxu0 %v43
    %344 = vmatprep.subr.mxu0 0.0
    %345 = vmatpush1.msra.mxu0 %v44
    %346 = vmatprep.subr.mxu0 0.0
    %347 = vmatpush1.msra.mxu0 %v45
    %348 = vmatprep.subr.mxu0 0.0
    %349 = vmatpush1.msra.mxu0 %v46
    %350 = vmatprep.subr.mxu0 0.0
    %351 = vmatpush1.msra.mxu0 %v47
    %352 = vmatprep.subr.mxu0 0.0
    %353 = vmatpush1.msra.mxu0 %v48
    %354 = vmatprep.subr.mxu0 0.0
    %355 = vmatpush1.msra.mxu0 %v49
    %356 = vmatprep.subr.mxu0 0.0
    %357 = vmatpush1.msra.mxu0 %v50
    %358 = vmatprep.subr.mxu0 0.0
    %359 = vmatpush1.msra.mxu0 %v51
    %360 = vmatprep.subr.mxu0 0.0
    %361 = vmatpush1.msra.mxu0 %v52
    %362 = vmatprep.subr.mxu0 0.0
    %363 = vmatpush1.msra.mxu0 %v53
    %364 = vmatprep.subr.mxu0 0.0
    %365 = vmatpush1.msra.mxu0 %v54
    %366 = vmatprep.subr.mxu0 0.0
    %367 = vmatpush1.msra.mxu0 %v55
    %368 = vmatprep.subr.mxu0 0.0
    %369 = vmatpush1.msra.mxu0 %v56
    %370 = vmatprep.subr.mxu0 0.0
    %371 = vmatpush1.msra.mxu0 %v57
    %372 = vmatprep.subr.mxu0 0.0
    %373 = vmatpush1.msra.mxu0 %v58
    %374 = vmatprep.subr.mxu0 0.0
    %375 = vmatpush1.msra.mxu0 0.0
    %376 = vmatprep.subr.mxu0 0.0
    %377 = vmatpush1.msra.mxu0 0.0
    %378 = vmatprep.subr.mxu0 0.0
    %379 = vmatpush1.msra.mxu0 0.0
    %380 = vmatprep.subr.mxu0 0.0
    %381 = vmatpush1.msra.mxu0 0.0
    %382 = vmatprep.subr.mxu0 0.0
    %383 = vmatpush1.msra.mxu0 0.0
    %384 = vmatprep.subr.mxu0 0.0
    %385 = vmatpush1.msra.mxu0 0.0
    %386 = vmatprep.subr.mxu0 0.0
    %387 = vmatpush1.msra.mxu0 0.0
    %388 = vmatprep.subr.mxu0 0.0
    %389 = vmatpush1.msra.mxu0 0.0
    %390 = vmatprep.subr.mxu0 0.0
    %391 = vmatpush1.msra.mxu0 0.0
    %392 = vmatprep.subr.mxu0 0.0
    %393 = vmatpush1.msra.mxu0 0.0
    %394 = vmatprep.subr.mxu0 0.0
    %395 = vmatpush1.msra.mxu0 0.0
    %396 = vmatprep.subr.mxu0 0.0
    %397 = vmatpush1.msra.mxu0 0.0
    %398 = vmatprep.subr.mxu0 0.0
    %399 = vmatpush1.msra.mxu0 0.0
    %400 = vmatprep.subr.mxu0 0.0
    %401 = vmatpush1.msra.mxu0 0.0
    %402 = vmatprep.subr.mxu0 0.0
    %403 = vmatpush1.msra.mxu0 0.0
    %404 = vmatprep.subr.mxu0 0.0
    %405 = vmatpush1.msra.mxu0 0.0
    %406 = vmatprep.mubr.f32.mxu0 0.0
    %407 = vmatmul.mubr.f32.gmra.mrb[0].mxu0 %v322
    %v408 = vpop.f32.mrb[0].mxu0
    %v409 = vadd.f32 %v341, %v408
    %v410 = vpop.f32.mrb[0].mxu0
    %411 = vmatprep.mubr.f32.mxu0 0.0
    %412 = vmatmul.mubr.f32.gmra.mrb[0].mxu0 %v323
    %v413 = vpop.f32.mrb[0].mxu0
    %v414 = vadd.f32 %v341, %v413
    %v415 = vpop.f32.mrb[0].mxu0
    %416 = vmatprep.mubr.f32.mxu0 0.0
    %417 = vmatmul.mubr.f32.gmra.mrb[0].mxu0 %v324
    %v418 = vpop.f32.mrb[0].mxu0
    %v419 = vadd.f32 %v341, %v418
    %v420 = vpop.f32.mrb[0].mxu0
    %421 = vmatprep.mubr.f32.mxu0 0.0
    %422 = vmatmul.mubr.f32.gmra.mrb[0].mxu0 %v325
    %v423 = vpop.f32.mrb[0].mxu0
    %v424 = vadd.f32 %v341, %v423
    %v425 = vpop.f32.mrb[0].mxu0
    %426 = vmatprep.mubr.f32.mxu0 0.0
    %427 = vmatmul.mubr.f32.gmra.mrb[0].mxu0 %v326
    %v428 = vpop.f32.mrb[0].mxu0
    %v429 = vadd.f32 %v341, %v428
    %v430 = vpop.f32.mrb[0].mxu0
    %431 = vmatprep.mubr.f32.mxu0 0.0
    %432 = vmatmul.mubr.f32.gmra.mrb[0].mxu0 %v327
    %v433 = vpop.f32.mrb[0].mxu0
    %v434 = vadd.f32 %v341, %v433
    %v435 = vpop.f32.mrb[0].mxu0
    %436 = vmatprep.mubr.f32.mxu0 0.0
    %437 = vmatmul.mubr.f32.gmra.mrb[0].mxu0 %v328
    %v438 = vpop.f32.mrb[0].mxu0
    %v439 = vadd.f32 %v341, %v438
    %v440 = vpop.f32.mrb[0].mxu0
    %441 = vmatprep.mubr.f32.mxu0 0.0
    %442 = vmatmul.mubr.f32.gmra.mrb[0].mxu0 %v329
    %v443 = vpop.f32.mrb[0].mxu0
    %v444 = vadd.f32 %v341, %v443
    %v445 = vpop.f32.mrb[0].mxu0
    %446 = vmatprep.mubr.f32.mxu0 0.0
    %447 = vmatmul.mubr.f32.gmra.mrb[0].mxu0 %v330
    %v448 = vpop.f32.mrb[0].mxu0
    %v449 = vadd.f32 %v341, %v448
    %v450 = vpop.f32.mrb[0].mxu0
    %451 = vmatprep.mubr.f32.mxu0 0.0
    %452 = vmatmul.mubr.f32.gmra.mrb[0].mxu0 %v331
    %v453 = vpop.f32.mrb[0].mxu0
    %v454 = vadd.f32 %v341, %v453
    %v455 = vpop.f32.mrb[0].mxu0
    %456 = vmatprep.mubr.f32.mxu0 0.0
    %457 = vmatmul.mubr.f32.gmra.mrb[0].mxu0 %v332
    %v458 = vpop.f32.mrb[0].mxu0
    %v459 = vadd.f32 %v341, %v458
    %v460 = vpop.f32.mrb[0].mxu0
    %461 = vmatprep.mubr.f32.mxu0 0.0
    %462 = vmatmul.mubr.f32.gmra.mrb[0].mxu0 %v333
    %v463 = vpop.f32.mrb[0].mxu0
    %v464 = vadd.f32 %v341, %v463
    %v465 = vpop.f32.mrb[0].mxu0
    %466 = vmatprep.mubr.f32.mxu0 0.0
    %467 = vmatmul.mubr.f32.gmra.mrb[0].mxu0 %v334
    %v468 = vpop.f32.mrb[0].mxu0
    %v469 = vadd.f32 %v341, %v468
    %v470 = vpop.f32.mrb[0].mxu0
    %471 = vmatprep.mubr.f32.mxu0 0.0
    %472 = vmatmul.mubr.f32.gmra.mrb[0].mxu0 %v335
    %v473 = vpop.f32.mrb[0].mxu0
    %v474 = vadd.f32 %v341, %v473
    %v475 = vpop.f32.mrb[0].mxu0
    %476 = vmatprep.mubr.f32.mxu0 0.0
    %477 = vmatmul.mubr.f32.gmra.mrb[0].mxu0 %v336
    %v478 = vpop.f32.mrb[0].mxu0
    %v479 = vadd.f32 %v341, %v478
    %v480 = vpop.f32.mrb[0].mxu0
    %481 = vmatprep.mubr.f32.mxu0 0.0
    %482 = vmatmul.mubr.f32.gmra.mrb[0].mxu0 %v337
    %v483 = vpop.f32.mrb[0].mxu0
    %v484 = vadd.f32 %v341, %v483
    %v485 = vpop.f32.mrb[0].mxu0
    %486 = vdwg.mxu0
    %487 = vmatprep.subr.mxu0 0.0
    %488 = vmatpush1.msra.mxu0 %v409
    %489 = vmatprep.subr.mxu0 0.0
    %490 = vmatpush1.msra.mxu0 %v414
    %491 = vmatprep.subr.mxu0 0.0
    %492 = vmatpush1.msra.mxu0 %v419
    %493 = vmatprep.subr.mxu0 0.0
    %494 = vmatpush1.msra.mxu0 %v424
    %495 = vmatprep.subr.mxu0 0.0
    %496 = vmatpush1.msra.mxu0 %v429
    %497 = vmatprep.subr.mxu0 0.0
    %498 = vmatpush1.msra.mxu0 %v434
    %499 = vmatprep.subr.mxu0 0.0
    %500 = vmatpush1.msra.mxu0 %v439
    %501 = vmatprep.subr.mxu0 0.0
    %502 = vmatpush1.msra.mxu0 %v444
    %503 = vmatprep.subr.mxu0 0.0
    %504 = vmatpush1.msra.mxu0 %v449
    %505 = vmatprep.subr.mxu0 0.0
    %506 = vmatpush1.msra.mxu0 %v454
    %507 = vmatprep.subr.mxu0 0.0
    %508 = vmatpush1.msra.mxu0 %v459
    %509 = vmatprep.subr.mxu0 0.0
    %510 = vmatpush1.msra.mxu0 %v464
    %511 = vmatprep.subr.mxu0 0.0
    %512 = vmatpush1.msra.mxu0 %v469
    %513 = vmatprep.subr.mxu0 0.0
    %514 = vmatpush1.msra.mxu0 %v474
    %515 = vmatprep.subr.mxu0 0.0
    %516 = vmatpush1.msra.mxu0 %v479
    %517 = vmatprep.subr.mxu0 0.0
    %518 = vmatpush1.msra.mxu0 %v484
    %519 = vmatprep.subr.mxu0 0.0
    %520 = vmatpush1.msra.mxu0 0.0
    %521 = vmatprep.subr.mxu0 0.0
    %522 = vmatpush1.msra.mxu0 0.0
    %523 = vmatprep.subr.mxu0 0.0
    %524 = vmatpush1.msra.mxu0 0.0
    %525 = vmatprep.subr.mxu0 0.0
    %526 = vmatpush1.msra.mxu0 0.0
    %527 = vmatprep.subr.mxu0 0.0
    %528 = vmatpush1.msra.mxu0 0.0
    %529 = vmatprep.subr.mxu0 0.0
    %530 = vmatpush1.msra.mxu0 0.0
    %531 = vmatprep.subr.mxu0 0.0
    %532 = vmatpush1.msra.mxu0 0.0
    %533 = vmatprep.subr.mxu0 0.0
    %534 = vmatpush1.msra.mxu0 0.0
    %535 = vmatprep.subr.mxu0 0.0
    %536 = vmatpush1.msra.mxu0 0.0
    %537 = vmatprep.subr.mxu0 0.0
    %538 = vmatpush1.msra.mxu0 0.0
    %539 = vmatprep.subr.mxu0 0.0
    %540 = vmatpush1.msra.mxu0 0.0
    %541 = vmatprep.subr.mxu0 0.0
    %542 = vmatpush1.msra.mxu0 0.0
    %543 = vmatprep.subr.mxu0 0.0
    %544 = vmatpush1.msra.mxu0 0.0
    %545 = vmatprep.subr.mxu0 0.0
    %546 = vmatpush1.msra.mxu0 0.0
    %547 = vmatprep.subr.mxu0 0.0
    %548 = vmatpush1.msra.mxu0 0.0
    %549 = vmatprep.subr.mxu0 0.0
    %550 = vmatpush1.msra.mxu0 0.0
    %551 = vmatprep.mubr.f32.mxu0 0.0
    %552 = vmatmul.mubr.f32.gmra.mrb[0].mxu0 1.0
    %v553 = vpop.f32.mrb[0].mxu0
    %v554 = vadd.f32 0.0, %v553
    %v555 = vpop.f32.mrb[0].mxu0
    %556 = vdwg.mxu0
    %v557 = vmul.f32 %v554, 0.0078125
    %v558 = vlaneseq
    %v559 = vshrl.u32 %v558, 7
    %v560 = vsub.s32 0, %v559
    %v561 = vrot.slane %v557, %v560
    %v562 = vsub.f32 %v409, %v561
    %v563 = vsub.f32 %v414, %v561
    %v564 = vsub.f32 %v419, %v561
    %v565 = vsub.f32 %v424, %v561
    %v566 = vsub.f32 %v429, %v561
    %v567 = vsub.f32 %v434, %v561
    %v568 = vsub.f32 %v439, %v561
    %v569 = vsub.f32 %v444, %v561
    %v570 = vsub.f32 %v449, %v561
    %v571 = vsub.f32 %v454, %v561
    %v572 = vsub.f32 %v459, %v561
    %v573 = vsub.f32 %v464, %v561
    %v574 = vsub.f32 %v469, %v561
    %v575 = vsub.f32 %v474, %v561
    %v576 = vsub.f32 %v479, %v561
    %v577 = vsub.f32 %v484, %v561
    %v578 = vmul.f32 %v562, %v562
    %v579 = vmul.f32 %v563, %v563
    %v580 = vmul.f32 %v564, %v564
    %v581 = vmul.f32 %v565, %v565
    %v582 = vmul.f32 %v566, %v566
    %v583 = vmul.f32 %v567, %v567
    %v584 = vmul.f32 %v568, %v568
    %v585 = vmul.f32 %v569, %v569
    %v586 = vmul.f32 %v570, %v570
    %v587 = vmul.f32 %v571, %v571
    %v588 = vmul.f32 %v572, %v572
    %v589 = vmul.f32 %v573, %v573
    %v590 = vmul.f32 %v574, %v574
    %v591 = vmul.f32 %v575, %v575
    %v592 = vmul.f32 %v576, %v576
    %v593 = vmul.f32 %v577, %v577
    %594 = vmatprep.subr.mxu0 0.0
    %595 = vmatpush1.msra.mxu0 %v578
    %596 = vmatprep.subr.mxu0 0.0
    %597 = vmatpush1.msra.mxu0 %v579
    %598 = vmatprep.subr.mxu0 0.0
    %599 = vmatpush1.msra.mxu0 %v580
    %600 = vmatprep.subr.mxu0 0.0
    %601 = vmatpush1.msra.mxu0 %v581
    %602 = vmatprep.subr.mxu0 0.0
    %603 = vmatpush1.msra.mxu0 %v582
    %604 = vmatprep.subr.mxu0 0.0
    %605 = vmatpush1.msra.mxu0 %v583
    %606 = vmatprep.subr.mxu0 0.0
    %607 = vmatpush1.msra.mxu0 %v584
    %608 = vmatprep.subr.mxu0 0.0
    %609 = vmatpush1.msra.mxu0 %v585
    %610 = vmatprep.subr.mxu0 0.0
    %611 = vmatpush1.msra.mxu0 %v586
    %612 = vmatprep.subr.mxu0 0.0
    %613 = vmatpush1.msra.mxu0 %v587
    %614 = vmatprep.subr.mxu0 0.0
    %615 = vmatpush1.msra.mxu0 %v588
    %616 = vmatprep.subr.mxu0 0.0
    %617 = vmatpush1.msra.mxu0 %v589
    %618 = vmatprep.subr.mxu0 0.0
    %619 = vmatpush1.msra.mxu0 %v590
    %620 = vmatprep.subr.mxu0 0.0
    %621 = vmatpush1.msra.mxu0 %v591
    %622 = vmatprep.subr.mxu0 0.0
    %623 = vmatpush1.msra.mxu0 %v592
    %624 = vmatprep.subr.mxu0 0.0
    %625 = vmatpush1.msra.mxu0 %v593
    %626 = vmatprep.subr.mxu0 0.0
    %627 = vmatpush1.msra.mxu0 0.0
    %628 = vmatprep.subr.mxu0 0.0
    %629 = vmatpush1.msra.mxu0 0.0
    %630 = vmatprep.subr.mxu0 0.0
    %631 = vmatpush1.msra.mxu0 0.0
    %632 = vmatprep.subr.mxu0 0.0
    %633 = vmatpush1.msra.mxu0 0.0
    %634 = vmatprep.subr.mxu0 0.0
    %635 = vmatpush1.msra.mxu0 0.0
    %636 = vmatprep.subr.mxu0 0.0
    %637 = vmatpush1.msra.mxu0 0.0
    %638 = vmatprep.subr.mxu0 0.0
    %639 = vmatpush1.msra.mxu0 0.0
    %640 = vmatprep.subr.mxu0 0.0
    %641 = vmatpush1.msra.mxu0 0.0
    %642 = vmatprep.subr.mxu0 0.0
    %643 = vmatpush1.msra.mxu0 0.0
    %644 = vmatprep.subr.mxu0 0.0
    %645 = vmatpush1.msra.mxu0 0.0
    %646 = vmatprep.subr.mxu0 0.0
    %647 = vmatpush1.msra.mxu0 0.0
    %648 = vmatprep.subr.mxu0 0.0
    %649 = vmatpush1.msra.mxu0 0.0
    %650 = vmatprep.subr.mxu0 0.0
    %651 = vmatpush1.msra.mxu0 0.0
    %652 = vmatprep.subr.mxu0 0.0
    %653 = vmatpush1.msra.mxu0 0.0
    %654 = vmatprep.subr.mxu0 0.0
    %655 = vmatpush1.msra.mxu0 0.0
    %656 = vmatprep.subr.mxu0 0.0
    %657 = vmatpush1.msra.mxu0 0.0
    %658 = vmatprep.mubr.f32.mxu0 0.0
    %659 = vmatmul.mubr.f32.gmra.mrb[0].mxu0 1.0
    %v660 = vpop.f32.mrb[0].mxu0
    %v661 = vadd.f32 0.0, %v660
    %v662 = vpop.f32.mrb[0].mxu0
    %663 = vdwg.mxu0
    %v664 = vmul.f32 %v661, 0.0078125
    %v665 = vadd.f32 %v664, 1e-05
    %v666 = vrsqrt.pop %v665
    %v667 = vlaneseq
    %v668 = vshrl.u32 %v667, 7
    %v669 = vsub.s32 0, %v668
    %v670 = vrot.slane %v666, %v669
    %v671 = vmul.f32 %v562, %v670
    %v672 = vmul.f32 %v563, %v670
    %v673 = vmul.f32 %v564, %v670
    %v674 = vmul.f32 %v565, %v670
    %v675 = vmul.f32 %v566, %v670
    %v676 = vmul.f32 %v567, %v670
    %v677 = vmul.f32 %v568, %v670
    %v678 = vmul.f32 %v569, %v670
    %v679 = vmul.f32 %v570, %v670
    %v680 = vmul.f32 %v571, %v670
    %v681 = vmul.f32 %v572, %v670
    %v682 = vmul.f32 %v573, %v670
    %v683 = vmul.f32 %v574, %v670
    %v684 = vmul.f32 %v575, %v670
    %v685 = vmul.f32 %v576, %v670
    %v686 = vmul.f32 %v577, %v670
    %v687 = vlaneseq
    %v688 = vshrl.u32 %v687, 7
    %v689 = vsub.s32 2, %v688
    %v690 = vrot.slane %v75, %v689
    %v691 = vmul.f32 %v671, %v690
    %v692 = vmul.f32 %v672, %v690
    %v693 = vmul.f32 %v673, %v690
    %v694 = vmul.f32 %v674, %v690
    %v695 = vmul.f32 %v675, %v690
    %v696 = vmul.f32 %v676, %v690
    %v697 = vmul.f32 %v677, %v690
    %v698 = vmul.f32 %v678, %v690
    %v699 = vmul.f32 %v679, %v690
    %v700 = vmul.f32 %v680, %v690
    %v701 = vmul.f32 %v681, %v690
    %v702 = vmul.f32 %v682, %v690
    %v703 = vmul.f32 %v683, %v690
    %v704 = vmul.f32 %v684, %v690
    %v705 = vmul.f32 %v685, %v690
    %v706 = vmul.f32 %v686, %v690
    %v707 = vlaneseq
    %v708 = vshrl.u32 %v707, 7
    %v709 = vsub.s32 3, %v708
    %v710 = vrot.slane %v75, %v709
    %v711 = vadd.f32 %v691, %v710
    %v712 = vadd.f32 %v692, %v710
    %v713 = vadd.f32 %v693, %v710
    %v714 = vadd.f32 %v694, %v710
    %v715 = vadd.f32 %v695, %v710
    %v716 = vadd.f32 %v696, %v710
    %v717 = vadd.f32 %v697, %v710
    %v718 = vadd.f32 %v698, %v710
    %v719 = vadd.f32 %v699, %v710
    %v720 = vadd.f32 %v700, %v710
    %v721 = vadd.f32 %v701, %v710
    %v722 = vadd.f32 %v702, %v710
    %v723 = vadd.f32 %v703, %v710
    %v724 = vadd.f32 %v704, %v710
    %v725 = vadd.f32 %v705, %v710
    %v726 = vadd.f32 %v706, %v710
    %v727 = vmul.f32 %v711, 0.5
    %v728 = vmul.f32 %v712, 0.5
    %v729 = vmul.f32 %v713, 0.5
    %v730 = vmul.f32 %v714, 0.5
    %v731 = vmul.f32 %v715, 0.5
    %v732 = vmul.f32 %v716, 0.5
    %v733 = vmul.f32 %v717, 0.5
    %v734 = vmul.f32 %v718, 0.5
    %v735 = vmul.f32 %v719, 0.5
    %v736 = vmul.f32 %v720, 0.5
    %v737 = vmul.f32 %v721, 0.5
    %v738 = vmul.f32 %v722, 0.5
    %v739 = vmul.f32 %v723, 0.5
    %v740 = vmul.f32 %v724, 0.5
    %v741 = vmul.f32 %v725, 0.5
    %v742 = vmul.f32 %v726, 0.5
    %v743 = vtanh.pop %v727
    %v744 = vtanh.pop %v728
    %v745 = vtanh.pop %v729
    %v746 = vtanh.pop %v730
    %v747 = vtanh.pop %v731
    %v748 = vtanh.pop %v732
    %v749 = vtanh.pop %v733
    %v750 = vtanh.pop %v734
    %v751 = vtanh.pop %v735
    %v752 = vtanh.pop %v736
    %v753 = vtanh.pop %v737
    %v754 = vtanh.pop %v738
    %v755 = vtanh.pop %v739
    %v756 = vtanh.pop %v740
    %v757 = vtanh.pop %v741
    %v758 = vtanh.pop %v742
    %v759 = vmul.f32 %v743, 0.5
    %v760 = vmul.f32 %v744, 0.5
    %v761 = vmul.f32 %v745, 0.5
    %v762 = vmul.f32 %v746, 0.5
    %v763 = vmul.f32 %v747, 0.5
    %v764 = vmul.f32 %v748, 0.5
    %v765 = vmul.f32 %v749, 0.5
    %v766 = vmul.f32 %v750, 0.5
    %v767 = vmul.f32 %v751, 0.5
    %v768 = vmul.f32 %v752, 0.5
    %v769 = vmul.f32 %v753, 0.5
    %v770 = vmul.f32 %v754, 0.5
    %v771 = vmul.f32 %v755, 0.5
    %v772 = vmul.f32 %v756, 0.5
    %v773 = vmul.f32 %v757, 0.5
    %v774 = vmul.f32 %v758, 0.5
    %v775 = vadd.f32 %v759, 0.5
    %v776 = vadd.f32 %v760, 0.5
    %v777 = vadd.f32 %v761, 0.5
    %v778 = vadd.f32 %v762, 0.5
    %v779 = vadd.f32 %v763, 0.5
    %v780 = vadd.f32 %v764, 0.5
    %v781 = vadd.f32 %v765, 0.5
    %v782 = vadd.f32 %v766, 0.5
    %v783 = vadd.f32 %v767, 0.5
    %v784 = vadd.f32 %v768, 0.5
    %v785 = vadd.f32 %v769, 0.5
    %v786 = vadd.f32 %v770, 0.5
    %v787 = vadd.f32 %v771, 0.5
    %v788 = vadd.f32 %v772, 0.5
    %v789 = vadd.f32 %v773, 0.5
    %v790 = vadd.f32 %v774, 0.5
    %v791 = vlaneseq
    %v792 = vshrl.u32 %v791, 7
    %v793 = vsub.s32 4, %v792
    %v794 = vrot.slane %v75, %v793
    %795 = vmatprep.subr.mxu0 0.0
    %796 = vmatpush1.msra.mxu0 %v59
    %797 = vmatprep.subr.mxu0 0.0
    %798 = vmatpush1.msra.mxu0 %v60
    %799 = vmatprep.subr.mxu0 0.0
    %800 = vmatpush1.msra.mxu0 %v61
    %801 = vmatprep.subr.mxu0 0.0
    %802 = vmatpush1.msra.mxu0 %v62
    %803 = vmatprep.subr.mxu0 0.0
    %804 = vmatpush1.msra.mxu0 %v63
    %805 = vmatprep.subr.mxu0 0.0
    %806 = vmatpush1.msra.mxu0 %v64
    %807 = vmatprep.subr.mxu0 0.0
    %808 = vmatpush1.msra.mxu0 %v65
    %809 = vmatprep.subr.mxu0 0.0
    %810 = vmatpush1.msra.mxu0 %v66
    %811 = vmatprep.subr.mxu0 0.0
    %812 = vmatpush1.msra.mxu0 %v67
    %813 = vmatprep.subr.mxu0 0.0
    %814 = vmatpush1.msra.mxu0 %v68
    %815 = vmatprep.subr.mxu0 0.0
    %816 = vmatpush1.msra.mxu0 %v69
    %817 = vmatprep.subr.mxu0 0.0
    %818 = vmatpush1.msra.mxu0 %v70
    %819 = vmatprep.subr.mxu0 0.0
    %820 = vmatpush1.msra.mxu0 %v71
    %821 = vmatprep.subr.mxu0 0.0
    %822 = vmatpush1.msra.mxu0 %v72
    %823 = vmatprep.subr.mxu0 0.0
    %824 = vmatpush1.msra.mxu0 %v73
    %825 = vmatprep.subr.mxu0 0.0
    %826 = vmatpush1.msra.mxu0 %v74
    %827 = vmatprep.subr.mxu0 0.0
    %828 = vmatpush1.msra.mxu0 0.0
    %829 = vmatprep.subr.mxu0 0.0
    %830 = vmatpush1.msra.mxu0 0.0
    %831 = vmatprep.subr.mxu0 0.0
    %832 = vmatpush1.msra.mxu0 0.0
    %833 = vmatprep.subr.mxu0 0.0
    %834 = vmatpush1.msra.mxu0 0.0
    %835 = vmatprep.subr.mxu0 0.0
    %836 = vmatpush1.msra.mxu0 0.0
    %837 = vmatprep.subr.mxu0 0.0
    %838 = vmatpush1.msra.mxu0 0.0
    %839 = vmatprep.subr.mxu0 0.0
    %840 = vmatpush1.msra.mxu0 0.0
    %841 = vmatprep.subr.mxu0 0.0
    %842 = vmatpush1.msra.mxu0 0.0
    %843 = vmatprep.subr.mxu0 0.0
    %844 = vmatpush1.msra.mxu0 0.0
    %845 = vmatprep.subr.mxu0 0.0
    %846 = vmatpush1.msra.mxu0 0.0
    %847 = vmatprep.subr.mxu0 0.0
    %848 = vmatpush1.msra.mxu0 0.0
    %849 = vmatprep.subr.mxu0 0.0
    %850 = vmatpush1.msra.mxu0 0.0
    %851 = vmatprep.subr.mxu0 0.0
    %852 = vmatpush1.msra.mxu0 0.0
    %853 = vmatprep.subr.mxu0 0.0
    %854 = vmatpush1.msra.mxu0 0.0
    %855 = vmatprep.subr.mxu0 0.0
    %856 = vmatpush1.msra.mxu0 0.0
    %857 = vmatprep.subr.mxu0 0.0
    %858 = vmatpush1.msra.mxu0 0.0
    %859 = vmatprep.mubr.f32.mxu0 0.0
    %860 = vmatmul.mubr.f32.gmra.mrb[0].mxu0 %v775
    %v861 = vpop.f32.mrb[0].mxu0
    %v862 = vadd.f32 %v794, %v861
    %v863 = vpop.f32.mrb[0].mxu0
    %864 = vmatprep.mubr.f32.mxu0 0.0
    %865 = vmatmul.mubr.f32.gmra.mrb[0].mxu0 %v776
    %v866 = vpop.f32.mrb[0].mxu0
    %v867 = vadd.f32 %v794, %v866
    %v868 = vpop.f32.mrb[0].mxu0
    %869 = vmatprep.mubr.f32.mxu0 0.0
    %870 = vmatmul.mubr.f32.gmra.mrb[0].mxu0 %v777
    %v871 = vpop.f32.mrb[0].mxu0
    %v872 = vadd.f32 %v794, %v871
    %v873 = vpop.f32.mrb[0].mxu0
    %874 = vmatprep.mubr.f32.mxu0 0.0
    %875 = vmatmul.mubr.f32.gmra.mrb[0].mxu0 %v778
    %v876 = vpop.f32.mrb[0].mxu0
    %v877 = vadd.f32 %v794, %v876
    %v878 = vpop.f32.mrb[0].mxu0
    %879 = vmatprep.mubr.f32.mxu0 0.0
    %880 = vmatmul.mubr.f32.gmra.mrb[0].mxu0 %v779
    %v881 = vpop.f32.mrb[0].mxu0
    %v882 = vadd.f32 %v794, %v881
    %v883 = vpop.f32.mrb[0].mxu0
    %884 = vmatprep.mubr.f32.mxu0 0.0
    %885 = vmatmul.mubr.f32.gmra.mrb[0].mxu0 %v780
    %v886 = vpop.f32.mrb[0].mxu0
    %v887 = vadd.f32 %v794, %v886
    %v888 = vpop.f32.mrb[0].mxu0
    %889 = vmatprep.mubr.f32.mxu0 0.0
    %890 = vmatmul.mubr.f32.gmra.mrb[0].mxu0 %v781
    %v891 = vpop.f32.mrb[0].mxu0
    %v892 = vadd.f32 %v794, %v891
    %v893 = vpop.f32.mrb[0].mxu0
    %894 = vmatprep.mubr.f32.mxu0 0.0
    %895 = vmatmul.mubr.f32.gmra.mrb[0].mxu0 %v782
    %v896 = vpop.f32.mrb[0].mxu0
    %v897 = vadd.f32 %v794, %v896
    %v898 = vpop.f32.mrb[0].mxu0
    %899 = vmatprep.mubr.f32.mxu0 0.0
    %900 = vmatmul.mubr.f32.gmra.mrb[0].mxu0 %v783
    %v901 = vpop.f32.mrb[0].mxu0
    %v902 = vadd.f32 %v794, %v901
    %v903 = vpop.f32.mrb[0].mxu0
    %904 = vmatprep.mubr.f32.mxu0 0.0
    %905 = vmatmul.mubr.f32.gmra.mrb[0].mxu0 %v784
    %v906 = vpop.f32.mrb[0].mxu0
    %v907 = vadd.f32 %v794, %v906
    %v908 = vpop.f32.mrb[0].mxu0
    %909 = vmatprep.mubr.f32.mxu0 0.0
    %910 = vmatmul.mubr.f32.gmra.mrb[0].mxu0 %v785
    %v911 = vpop.f32.mrb[0].mxu0
    %v912 = vadd.f32 %v794, %v911
    %v913 = vpop.f32.mrb[0].mxu0
    %914 = vmatprep.mubr.f32.mxu0 0.0
    %915 = vmatmul.mubr.f32.gmra.mrb[0].mxu0 %v786
    %v916 = vpop.f32.mrb[0].mxu0
    %v917 = vadd.f32 %v794, %v916
    %v918 = vpop.f32.mrb[0].mxu0
    %919 = vmatprep.mubr.f32.mxu0 0.0
    %920 = vmatmul.mubr.f32.gmra.mrb[0].mxu0 %v787
    %v921 = vpop.f32.mrb[0].mxu0
    %v922 = vadd.f32 %v794, %v921
    %v923 = vpop.f32.mrb[0].mxu0
    %924 = vmatprep.mubr.f32.mxu0 0.0
    %925 = vmatmul.mubr.f32.gmra.mrb[0].mxu0 %v788
    %v926 = vpop.f32.mrb[0].mxu0
    %v927 = vadd.f32 %v794, %v926
    %v928 = vpop.f32.mrb[0].mxu0
    %929 = vmatprep.mubr.f32.mxu0 0.0
    %930 = vmatmul.mubr.f32.gmra.mrb[0].mxu0 %v789
    %v931 = vpop.f32.mrb[0].mxu0
    %v932 = vadd.f32 %v794, %v931
    %v933 = vpop.f32.mrb[0].mxu0
    %934 = vmatprep.mubr.f32.mxu0 0.0
    %935 = vmatmul.mubr.f32.gmra.mrb[0].mxu0 %v790
    %v936 = vpop.f32.mrb[0].mxu0
    %v937 = vadd.f32 %v794, %v936
    %v938 = vpop.f32.mrb[0].mxu0
    %939 = vdwg.mxu0
    %940 = vmatprep.subr.mxu0 0.0
    %941 = vmatpush1.msra.mxu0 %v862
    %942 = vmatprep.subr.mxu0 0.0
    %943 = vmatpush1.msra.mxu0 %v867
    %944 = vmatprep.subr.mxu0 0.0
    %945 = vmatpush1.msra.mxu0 %v872
    %946 = vmatprep.subr.mxu0 0.0
    %947 = vmatpush1.msra.mxu0 %v877
    %948 = vmatprep.subr.mxu0 0.0
    %949 = vmatpush1.msra.mxu0 %v882
    %950 = vmatprep.subr.mxu0 0.0
    %951 = vmatpush1.msra.mxu0 %v887
    %952 = vmatprep.subr.mxu0 0.0
    %953 = vmatpush1.msra.mxu0 %v892
    %954 = vmatprep.subr.mxu0 0.0
    %955 = vmatpush1.msra.mxu0 %v897
    %956 = vmatprep.subr.mxu0 0.0
    %957 = vmatpush1.msra.mxu0 %v902
    %958 = vmatprep.subr.mxu0 0.0
    %959 = vmatpush1.msra.mxu0 %v907
    %960 = vmatprep.subr.mxu0 0.0
    %961 = vmatpush1.msra.mxu0 %v912
    %962 = vmatprep.subr.mxu0 0.0
    %963 = vmatpush1.msra.mxu0 %v917
    %964 = vmatprep.subr.mxu0 0.0
    %965 = vmatpush1.msra.mxu0 %v922
    %966 = vmatprep.subr.mxu0 0.0
    %967 = vmatpush1.msra.mxu0 %v927
    %968 = vmatprep.subr.mxu0 0.0
    %969 = vmatpush1.msra.mxu0 %v932
    %970 = vmatprep.subr.mxu0 0.0
    %971 = vmatpush1.msra.mxu0 %v937
    %972 = vmatprep.subr.mxu0 0.0
    %973 = vmatpush1.msra.mxu0 0.0
    %974 = vmatprep.subr.mxu0 0.0
    %975 = vmatpush1.msra.mxu0 0.0
    %976 = vmatprep.subr.mxu0 0.0
    %977 = vmatpush1.msra.mxu0 0.0
    %978 = vmatprep.subr.mxu0 0.0
    %979 = vmatpush1.msra.mxu0 0.0
    %980 = vmatprep.subr.mxu0 0.0
    %981 = vmatpush1.msra.mxu0 0.0
    %982 = vmatprep.subr.mxu0 0.0
    %983 = vmatpush1.msra.mxu0 0.0
    %984 = vmatprep.subr.mxu0 0.0
    %985 = vmatpush1.msra.mxu0 0.0
    %986 = vmatprep.subr.mxu0 0.0
    %987 = vmatpush1.msra.mxu0 0.0
    %988 = vmatprep.subr.mxu0 0.0
    %989 = vmatpush1.msra.mxu0 0.0
    %990 = vmatprep.subr.mxu0 0.0
    %991 = vmatpush1.msra.mxu0 0.0
    %992 = vmatprep.subr.mxu0 0.0
    %993 = vmatpush1.msra.mxu0 0.0
    %994 = vmatprep.subr.mxu0 0.0
    %995 = vmatpush1.msra.mxu0 0.0
    %996 = vmatprep.subr.mxu0 0.0
    %997 = vmatpush1.msra.mxu0 0.0
    %998 = vmatprep.subr.mxu0 0.0
    %999 = vmatpush1.msra.mxu0 0.0
    %1000 = vmatprep.subr.mxu0 0.0
    %1001 = vmatpush1.msra.mxu0 0.0
    %1002 = vmatprep.subr.mxu0 0.0
    %1003 = vmatpush1.msra.mxu0 0.0
    %1004 = vmatprep.mubr.f32.mxu0 0.0
    %1005 = vmatmul.mubr.f32.gmra.mrb[0].mxu0 1.0
    %v1006 = vpop.f32.mrb[0].mxu0
    %v1007 = vadd.f32 0.0, %v1006
    %v1008 = vpop.f32.mrb[0].mxu0
    %1009 = vdwg.mxu0
    %v1010 = vmul.f32 %v1007, 0.0078125
    %v1011 = vlaneseq
    %v1012 = vshrl.u32 %v1011, 7
    %v1013 = vsub.s32 0, %v1012
    %v1014 = vrot.slane %v1010, %v1013
    %v1015 = vsub.f32 %v862, %v1014
    %v1016 = vsub.f32 %v867, %v1014
    %v1017 = vsub.f32 %v872, %v1014
    %v1018 = vsub.f32 %v877, %v1014
    %v1019 = vsub.f32 %v882, %v1014
    %v1020 = vsub.f32 %v887, %v1014
    %v1021 = vsub.f32 %v892, %v1014
    %v1022 = vsub.f32 %v897, %v1014
    %v1023 = vsub.f32 %v902, %v1014
    %v1024 = vsub.f32 %v907, %v1014
    %v1025 = vsub.f32 %v912, %v1014
    %v1026 = vsub.f32 %v917, %v1014
    %v1027 = vsub.f32 %v922, %v1014
    %v1028 = vsub.f32 %v927, %v1014
    %v1029 = vsub.f32 %v932, %v1014
    %v1030 = vsub.f32 %v937, %v1014
    %v1031 = vmul.f32 %v1015, %v1015
    %v1032 = vmul.f32 %v1016, %v1016
    %v1033 = vmul.f32 %v1017, %v1017
    %v1034 = vmul.f32 %v1018, %v1018
    %v1035 = vmul.f32 %v1019, %v1019
    %v1036 = vmul.f32 %v1020, %v1020
    %v1037 = vmul.f32 %v1021, %v1021
    %v1038 = vmul.f32 %v1022, %v1022
    %v1039 = vmul.f32 %v1023, %v1023
    %v1040 = vmul.f32 %v1024, %v1024
    %v1041 = vmul.f32 %v1025, %v1025
    %v1042 = vmul.f32 %v1026, %v1026
    %v1043 = vmul.f32 %v1027, %v1027
    %v1044 = vmul.f32 %v1028, %v1028
    %v1045 = vmul.f32 %v1029, %v1029
    %v1046 = vmul.f32 %v1030, %v1030
    %1047 = vmatprep.subr.mxu0 0.0
    %1048 = vmatpush1.msra.mxu0 %v1031
    %1049 = vmatprep.subr.mxu0 0.0
    %1050 = vmatpush1.msra.mxu0 %v1032
    %1051 = vmatprep.subr.mxu0 0.0
    %1052 = vmatpush1.msra.mxu0 %v1033
    %1053 = vmatprep.subr.mxu0 0.0
    %1054 = vmatpush1.msra.mxu0 %v1034
    %1055 = vmatprep.subr.mxu0 0.0
    %1056 = vmatpush1.msra.mxu0 %v1035
    %1057 = vmatprep.subr.mxu0 0.0
    %1058 = vmatpush1.msra.mxu0 %v1036
    %1059 = vmatprep.subr.mxu0 0.0
    %1060 = vmatpush1.msra.mxu0 %v1037
    %1061 = vmatprep.subr.mxu0 0.0
    %1062 = vmatpush1.msra.mxu0 %v1038
    %1063 = vmatprep.subr.mxu0 0.0
    %1064 = vmatpush1.msra.mxu0 %v1039
    %1065 = vmatprep.subr.mxu0 0.0
    %1066 = vmatpush1.msra.mxu0 %v1040
    %1067 = vmatprep.subr.mxu0 0.0
    %1068 = vmatpush1.msra.mxu0 %v1041
    %1069 = vmatprep.subr.mxu0 0.0
    %1070 = vmatpush1.msra.mxu0 %v1042
    %1071 = vmatprep.subr.mxu0 0.0
    %1072 = vmatpush1.msra.mxu0 %v1043
    %1073 = vmatprep.subr.mxu0 0.0
    %1074 = vmatpush1.msra.mxu0 %v1044
    %1075 = vmatprep.subr.mxu0 0.0
    %1076 = vmatpush1.msra.mxu0 %v1045
    %1077 = vmatprep.subr.mxu0 0.0
    %1078 = vmatpush1.msra.mxu0 %v1046
    %1079 = vmatprep.subr.mxu0 0.0
    %1080 = vmatpush1.msra.mxu0 0.0
    %1081 = vmatprep.subr.mxu0 0.0
    %1082 = vmatpush1.msra.mxu0 0.0
    %1083 = vmatprep.subr.mxu0 0.0
    %1084 = vmatpush1.msra.mxu0 0.0
    %1085 = vmatprep.subr.mxu0 0.0
    %1086 = vmatpush1.msra.mxu0 0.0
    %1087 = vmatprep.subr.mxu0 0.0
    %1088 = vmatpush1.msra.mxu0 0.0
    %1089 = vmatprep.subr.mxu0 0.0
    %1090 = vmatpush1.msra.mxu0 0.0
    %1091 = vmatprep.subr.mxu0 0.0
    %1092 = vmatpush1.msra.mxu0 0.0
    %1093 = vmatprep.subr.mxu0 0.0
    %1094 = vmatpush1.msra.mxu0 0.0
    %1095 = vmatprep.subr.mxu0 0.0
    %1096 = vmatpush1.msra.mxu0 0.0
    %1097 = vmatprep.subr.mxu0 0.0
    %1098 = vmatpush1.msra.mxu0 0.0
    %1099 = vmatprep.subr.mxu0 0.0
    %1100 = vmatpush1.msra.mxu0 0.0
    %1101 = vmatprep.subr.mxu0 0.0
    %1102 = vmatpush1.msra.mxu0 0.0
    %1103 = vmatprep.subr.mxu0 0.0
    %1104 = vmatpush1.msra.mxu0 0.0
    %1105 = vmatprep.subr.mxu0 0.0
    %1106 = vmatpush1.msra.mxu0 0.0
    %1107 = vmatprep.subr.mxu0 0.0
    %1108 = vmatpush1.msra.mxu0 0.0
    %1109 = vmatprep.subr.mxu0 0.0
    %1110 = vmatpush1.msra.mxu0 0.0
    %1111 = vmatprep.mubr.f32.mxu0 0.0
    %1112 = vmatmul.mubr.f32.gmra.mrb[0].mxu0 1.0
    %v1113 = vpop.f32.mrb[0].mxu0
    %v1114 = vadd.f32 0.0, %v1113
    %v1115 = vpop.f32.mrb[0].mxu0
    %1116 = vdwg.mxu0
    %v1117 = vmul.f32 %v1114, 0.0078125
    %v1118 = vadd.f32 %v1117, 1e-05
    %v1119 = vrsqrt.pop %v1118
    %v1120 = vlaneseq
    %v1121 = vshrl.u32 %v1120, 7
    %v1122 = vsub.s32 0, %v1121
    %v1123 = vrot.slane %v1119, %v1122
    %v1124 = vmul.f32 %v1015, %v1123
    %v1125 = vmul.f32 %v1016, %v1123
    %v1126 = vmul.f32 %v1017, %v1123
    %v1127 = vmul.f32 %v1018, %v1123
    %v1128 = vmul.f32 %v1019, %v1123
    %v1129 = vmul.f32 %v1020, %v1123
    %v1130 = vmul.f32 %v1021, %v1123
    %v1131 = vmul.f32 %v1022, %v1123
    %v1132 = vmul.f32 %v1023, %v1123
    %v1133 = vmul.f32 %v1024, %v1123
    %v1134 = vmul.f32 %v1025, %v1123
    %v1135 = vmul.f32 %v1026, %v1123
    %v1136 = vmul.f32 %v1027, %v1123
    %v1137 = vmul.f32 %v1028, %v1123
    %v1138 = vmul.f32 %v1029, %v1123
    %v1139 = vmul.f32 %v1030, %v1123
    %v1140 = vlaneseq
    %v1141 = vshrl.u32 %v1140, 7
    %v1142 = vsub.s32 5, %v1141
    %v1143 = vrot.slane %v75, %v1142
    %v1144 = vmul.f32 %v1124, %v1143
    %v1145 = vmul.f32 %v1125, %v1143
    %v1146 = vmul.f32 %v1126, %v1143
    %v1147 = vmul.f32 %v1127, %v1143
    %v1148 = vmul.f32 %v1128, %v1143
    %v1149 = vmul.f32 %v1129, %v1143
    %v1150 = vmul.f32 %v1130, %v1143
    %v1151 = vmul.f32 %v1131, %v1143
    %v1152 = vmul.f32 %v1132, %v1143
    %v1153 = vmul.f32 %v1133, %v1143
    %v1154 = vmul.f32 %v1134, %v1143
    %v1155 = vmul.f32 %v1135, %v1143
    %v1156 = vmul.f32 %v1136, %v1143
    %v1157 = vmul.f32 %v1137, %v1143
    %v1158 = vmul.f32 %v1138, %v1143
    %v1159 = vmul.f32 %v1139, %v1143
    %v1160 = vlaneseq
    %v1161 = vshrl.u32 %v1160, 7
    %v1162 = vsub.s32 6, %v1161
    %v1163 = vrot.slane %v75, %v1162
    %v1164 = vadd.f32 %v1144, %v1163
    %v1165 = vadd.f32 %v1145, %v1163
    %v1166 = vadd.f32 %v1146, %v1163
    %v1167 = vadd.f32 %v1147, %v1163
    %v1168 = vadd.f32 %v1148, %v1163
    %v1169 = vadd.f32 %v1149, %v1163
    %v1170 = vadd.f32 %v1150, %v1163
    %v1171 = vadd.f32 %v1151, %v1163
    %v1172 = vadd.f32 %v1152, %v1163
    %v1173 = vadd.f32 %v1153, %v1163
    %v1174 = vadd.f32 %v1154, %v1163
    %v1175 = vadd.f32 %v1155, %v1163
    %v1176 = vadd.f32 %v1156, %v1163
    %v1177 = vadd.f32 %v1157, %v1163
    %v1178 = vadd.f32 %v1158, %v1163
    %v1179 = vadd.f32 %v1159, %v1163
    %v1180 = vmul.f32 %v1164, 0.5
    %v1181 = vmul.f32 %v1165, 0.5
    %v1182 = vmul.f32 %v1166, 0.5
    %v1183 = vmul.f32 %v1167, 0.5
    %v1184 = vmul.f32 %v1168, 0.5
    %v1185 = vmul.f32 %v1169, 0.5
    %v1186 = vmul.f32 %v1170, 0.5
    %v1187 = vmul.f32 %v1171, 0.5
    %v1188 = vmul.f32 %v1172, 0.5
    %v1189 = vmul.f32 %v1173, 0.5
    %v1190 = vmul.f32 %v1174, 0.5
    %v1191 = vmul.f32 %v1175, 0.5
    %v1192 = vmul.f32 %v1176, 0.5
    %v1193 = vmul.f32 %v1177, 0.5
    %v1194 = vmul.f32 %v1178, 0.5
    %v1195 = vmul.f32 %v1179, 0.5
    %v1196 = vtanh.pop %v1180
    %v1197 = vtanh.pop %v1181
    %v1198 = vtanh.pop %v1182
    %v1199 = vtanh.pop %v1183
    %v1200 = vtanh.pop %v1184
    %v1201 = vtanh.pop %v1185
    %v1202 = vtanh.pop %v1186
    %v1203 = vtanh.pop %v1187
    %v1204 = vtanh.pop %v1188
    %v1205 = vtanh.pop %v1189
    %v1206 = vtanh.pop %v1190
    %v1207 = vtanh.pop %v1191
    %v1208 = vtanh.pop %v1192
    %v1209 = vtanh.pop %v1193
    %v1210 = vtanh.pop %v1194
    %v1211 = vtanh.pop %v1195
    %v1212 = vmul.f32 %v1196, 0.5
    %v1213 = vmul.f32 %v1197, 0.5
    %v1214 = vmul.f32 %v1198, 0.5
    %v1215 = vmul.f32 %v1199, 0.5
    %v1216 = vmul.f32 %v1200, 0.5
    %v1217 = vmul.f32 %v1201, 0.5
    %v1218 = vmul.f32 %v1202, 0.5
    %v1219 = vmul.f32 %v1203, 0.5
    %v1220 = vmul.f32 %v1204, 0.5
    %v1221 = vmul.f32 %v1205, 0.5
    %v1222 = vmul.f32 %v1206, 0.5
    %v1223 = vmul.f32 %v1207, 0.5
    %v1224 = vmul.f32 %v1208, 0.5
    %v1225 = vmul.f32 %v1209, 0.5
    %v1226 = vmul.f32 %v1210, 0.5
    %v1227 = vmul.f32 %v1211, 0.5
    %v1228 = vadd.f32 %v1212, 0.5
    %v1229 = vadd.f32 %v1213, 0.5
    %v1230 = vadd.f32 %v1214, 0.5
    %v1231 = vadd.f32 %v1215, 0.5
    %v1232 = vadd.f32 %v1216, 0.5
    %v1233 = vadd.f32 %v1217, 0.5
    %v1234 = vadd.f32 %v1218, 0.5
    %v1235 = vadd.f32 %v1219, 0.5
    %v1236 = vadd.f32 %v1220, 0.5
    %v1237 = vadd.f32 %v1221, 0.5
    %v1238 = vadd.f32 %v1222, 0.5
    %v1239 = vadd.f32 %v1223, 0.5
    %v1240 = vadd.f32 %v1224, 0.5
    %v1241 = vadd.f32 %v1225, 0.5
    %v1242 = vadd.f32 %v1226, 0.5
    %v1243 = vadd.f32 %v1227, 0.5
    %1244 = vst [vmem:[%s2] sm:$0xff] %v1228
    %1245 = vst [vmem:[%s2 + $0x8] sm:$0xff] %v1229
    %1246 = vst [vmem:[%s2 + $0x10] sm:$0xff] %v1230
    %1247 = vst [vmem:[%s2 + $0x18] sm:$0xff] %v1231
    %1248 = vst [vmem:[%s2 + $0x20] sm:$0xff] %v1232
    %1249 = vst [vmem:[%s2 + $0x28] sm:$0xff] %v1233
    %1250 = vst [vmem:[%s2 + $0x30] sm:$0xff] %v1234
    %1251 = vst [vmem:[%s2 + $0x38] sm:$0xff] %v1235
    %1252 = vst [vmem:[%s2 + $0x40] sm:$0xff] %v1236
    %1253 = vst [vmem:[%s2 + $0x48] sm:$0xff] %v1237
    %1254 = vst [vmem:[%s2 + $0x50] sm:$0xff] %v1238
    %1255 = vst [vmem:[%s2 + $0x58] sm:$0xff] %v1239
    %1256 = vst [vmem:[%s2 + $0x60] sm:$0xff] %v1240
    %1257 = vst [vmem:[%s2 + $0x68] sm:$0xff] %v1241
    %1258 = vst [vmem:[%s2 + $0x70] sm:$0xff] %v1242
    %1259 = vst [vmem:[%s2 + $0x78] sm:$0xff] %v1243
    // Predicated region
    $region14: #{brownian_logsig_generator.1} parent=1 // pred_check
      _
    $region15: #{brownian_logsig_generator.1} parent=1 // pred_check_branch
      %1261 = sbr.rel (0) target = $region17
    $region16: #{brownian_logsig_generator.1} parent=1 // pred_region
      _
    $region17: #{brownian_logsig_generator.1} parent=1 // pred_fallthru
      _
    // Predicated region
    $region18: #{brownian_logsig_generator.1} parent=1 // pred_check
      _
    $region19: #{brownian_logsig_generator.1} parent=1 // pred_check_branch
      %1263 = sbr.rel (0) target = $region21
    $region20: #{brownian_logsig_generator.1} parent=1 // pred_region
      _
    $region21: #{brownian_logsig_generator.1} parent=1 // pred_fallthru
      _
    %1264 = vsyncpa [#allocation3], 1

</llo_original>
